<compile_context>
chip_gen: v5e
topology: v5e:2x2
jax: 0.10.0
libtpu: 0.0.40
codegen_flags: <defaults>
</compile_context>

<pallas_src>
import functools

import jax
import jax.numpy as jnp
from jax.experimental import pallas as pl
from jax.experimental.pallas import tpu as pltpu

H1, H2 = 400, 300          # logical hidden sizes (PyTorch module)
H1_P, H2_P = 512, 384      # lane-padded hidden sizes (multiples of 128)


def _round_up(n, m):
    return ((n + m - 1) // m) * m


def _pad2d(a, rows, cols):
    return jnp.pad(a, ((0, rows - a.shape[0]), (0, cols - a.shape[1])))


def _pick_tm(batch):
    """Batch tile: big tiles to amortize ~0.35 us/step overhead and fill the
    256-wide MXU, but >= 2 grid steps (when batch permits) so v7x's second
    TensorCore is not idle."""
    if batch >= 1024:
        return 512
    if batch >= 512:
        return 256
    if batch >= 256:
        return 128
    if batch >= 16:
        return _round_up(pl.cdiv(batch, 2), 8)   # two roughly-equal tiles
    return _round_up(max(batch, 1), 8)


def mlp_actor_kernel(x_ref, w1_ref, b1_ref, w2_ref, b2_ref, w3_ref, b3_ref, o_ref):
    """One batch tile of y = tanh(tanh(tanh(xW1+b1)W2+b2)W3+b3).

    Matmul operands are bf16 (native MXU), accumulation + bias-add + tanh in f32.
    """
    x = x_ref[...]  # already bf16
    h1 = jnp.tanh(
        jnp.dot(x, w1_ref[...], preferred_element_type=jnp.float32) + b1_ref[...]
    )
    h2 = jnp.tanh(
        jnp.dot(h1.astype(jnp.bfloat16), w2_ref[...],
                preferred_element_type=jnp.float32) + b2_ref[...]
    )
    h3 = jnp.tanh(
        jnp.dot(h2.astype(jnp.bfloat16), w3_ref[...],
                preferred_element_type=jnp.float32) + b3_ref[...]
    )
    o_ref[...] = h3.astype(o_ref.dtype)


def pad_model_actor_params(params, obs_size, act_size):
    """Pad + cast parameters ONCE (outside the per-call forward).

    Zero-padding is exact: tanh(0)=0 and zero rows/cols of W contribute nothing.
    Weights -> bf16 (matmul operands), biases stay f32 (VPU adds).
    """
    obs_p = _round_up(max(obs_size, 1), 8)     # sublane multiple only; no 128 pad
    act_p = _round_up(max(act_size, 1), 128)   # lane-dense output
    return {
        "w1": _pad2d(params["w1"], obs_p, H1_P).astype(jnp.bfloat16),
        "b1": _pad2d(params["b1"], 1, H1_P).astype(jnp.float32),
        "w2": _pad2d(params["w2"], H1_P, H2_P).astype(jnp.bfloat16),
        "b2": _pad2d(params["b2"], 1, H2_P).astype(jnp.float32),
        "w3": _pad2d(params["w3"], H2_P, act_p).astype(jnp.bfloat16),
        "b3": _pad2d(params["b3"], 1, act_p).astype(jnp.float32),
    }


@functools.partial(jax.jit, static_argnames=("act_size",))
def model_actor_forward(x, padded_params, *, act_size):
    """Pallas forward: returns mu(x), matching ModelActor.forward.

    `padded_params` must come from pad_model_actor_params (padded + bf16 weights).
    """
    batch = x.shape[0]
    w1 = padded_params["w1"]
    b1 = padded_params["b1"]
    w2 = padded_params["w2"]
    b2 = padded_params["b2"]
    w3 = padded_params["w3"]
    b3 = padded_params["b3"]
    obs_p = w1.shape[0]
    act_p = w3.shape[1]

    tm = _pick_tm(batch)
    batch_p = _round_up(batch, tm)
    grid = (batch_p // tm,)

    # Only x is padded per-call (batch to tile multiple, obs to obs_p), cast to
    # bf16 to halve its HBM stream.
    xp = _pad2d(x, batch_p, obs_p).astype(jnp.bfloat16)

    # Weights/biases: constant index_map -> DMA'd once, VMEM-resident across steps.
    resident = lambda shape: pl.BlockSpec(shape, lambda i: (0, 0))

    flops = 2 * batch_p * (obs_p * H1_P + H1_P * H2_P + H2_P * act_p)
    transcendentals = batch_p * (H1_P + H2_P + act_p)
    bytes_accessed = (
        batch_p * obs_p * 2                                   # x (bf16)
        + (obs_p * H1_P + H1_P * H2_P + H2_P * act_p) * 2     # weights (bf16)
        + (H1_P + H2_P + act_p) * 4                           # biases (f32)
        + batch_p * act_p * 4                                 # output (f32)
    )

    out_p = pl.pallas_call(
        mlp_actor_kernel,
        out_shape=jax.ShapeDtypeStruct((batch_p, act_p), x.dtype),
        grid_spec=pltpu.PrefetchScalarGridSpec(
            num_scalar_prefetch=0,
            grid=grid,
            in_specs=[
                pl.BlockSpec((tm, obs_p), lambda i: (i, 0)),   # x tile (pipelined)
                resident((obs_p, H1_P)),                       # w1
                resident((1, H1_P)),                           # b1
                resident((H1_P, H2_P)),                        # w2
                resident((1, H2_P)),                           # b2
                resident((H2_P, act_p)),                       # w3
                resident((1, act_p)),                          # b3
            ],
            out_specs=pl.BlockSpec((tm, act_p), lambda i: (i, 0)),
        ),
        compiler_params=pltpu.CompilerParams(
            dimension_semantics=("parallel",),  # v7x: shard batch grid over 2 TCs
        ),
        cost_estimate=pl.CostEstimate(
            flops=flops,
            transcendentals=transcendentals,
            bytes_accessed=bytes_accessed,
        ),
    )(xp, w1, b1, w2, b2, w3, b3)

    return out_p[:batch, :act_size]


def init_model_actor_params(key, obs_size, act_size):
    """Deterministic init mirroring nn.Linear default (uniform +/- 1/sqrt(fan_in))."""
    def linear_init(k, fan_in, fan_out):
        kw, kb = jax.random.split(k)
        bound = 1.0 / jnp.sqrt(jnp.float32(fan_in))
        # stored as (in, out) so kernel computes x @ W
        w = jax.random.uniform(kw, (fan_in, fan_out), jnp.float32, -bound, bound)
        b = jax.random.uniform(kb, (1, fan_out), jnp.float32, -bound, bound)
        return w, b

    k1, k2, k3 = jax.random.split(key, 3)
    w1, b1 = linear_init(k1, obs_size, H1)
    w2, b2 = linear_init(k2, H1, H2)
    w3, b3 = linear_init(k3, H2, act_size)
    # logstd is a learned parameter of ModelActor but is NOT used in forward().
    logstd = jnp.zeros((act_size,), jnp.float32)
    return {"w1": w1, "b1": b1, "w2": w2, "b2": b2, "w3": w3, "b3": b3,
            "logstd": logstd}


def model_actor_reference(x, params):
    """Pure-JAX f32 reference for correctness checking."""
    h = jnp.tanh(x @ params["w1"] + params["b1"])
    h = jnp.tanh(h @ params["w2"] + params["b2"])
    return jnp.tanh(h @ params["w3"] + params["b3"])


if __name__ == "__main__":
    obs_size, act_size, batch = 32, 8, 2

    key = jax.random.PRNGKey(0)
    kp, kx = jax.random.split(key)
    params = init_model_actor_params(kp, obs_size, act_size)
    x = jax.random.normal(kx, (batch, obs_size), jnp.float32)

    # Pad/cast parameters ONCE (hoisted out of the per-call forward).
    padded_params = pad_model_actor_params(params, obs_size, act_size)

    out = model_actor_forward(x, padded_params, act_size=act_size)
    out = jax.block_until_ready(out)

    ref = model_actor_reference(x, params)
    assert out.shape == (batch, act_size), out.shape
    # bf16 matmul operands (f32 accumulation) drift slightly vs. the f32 reference.
    assert jnp.allclose(out, ref, atol=3e-2, rtol=3e-2), "mismatch vs reference"

    print("KERNEL_OK")
</pallas_src>

<mosaic_0001>
module attributes {stable_mosaic.version = 11 : i64} {
  func.func @mlp_actor_kernel(%arg0: i32, %arg1: memref<8x32xbf16, #tpu.memory_space<vmem>>, %arg2: memref<32x512xbf16, #tpu.memory_space<vmem>>, %arg3: memref<1x512xf32, #tpu.memory_space<vmem>>, %arg4: memref<512x384xbf16, #tpu.memory_space<vmem>>, %arg5: memref<1x384xf32, #tpu.memory_space<vmem>>, %arg6: memref<384x128xbf16, #tpu.memory_space<vmem>>, %arg7: memref<1x128xf32, #tpu.memory_space<vmem>>, %arg8: memref<8x128xf32, #tpu.memory_space<vmem>>) attributes {dimension_semantics = [#tpu.dimension_semantics<parallel>], iteration_bounds = array<i64: 1>, scalar_prefetch = 0 : i64, scratch_operands = 0 : i64, tpu.core_type = #tpu.core_type<tc>, window_params = [{transform_indices = @transform_0, window_bounds = array<i64: 8, 32>}, {pipeline_mode = #tpu.pipeline_mode<synchronous>, transform_indices = @transform_1, window_bounds = array<i64: 32, 512>}, {pipeline_mode = #tpu.pipeline_mode<synchronous>, transform_indices = @transform_2, window_bounds = array<i64: 1, 512>}, {pipeline_mode = #tpu.pipeline_mode<synchronous>, transform_indices = @transform_3, window_bounds = array<i64: 512, 384>}, {pipeline_mode = #tpu.pipeline_mode<synchronous>, transform_indices = @transform_4, window_bounds = array<i64: 1, 384>}, {pipeline_mode = #tpu.pipeline_mode<synchronous>, transform_indices = @transform_5, window_bounds = array<i64: 384, 128>}, {pipeline_mode = #tpu.pipeline_mode<synchronous>, transform_indices = @transform_6, window_bounds = array<i64: 1, 128>}, {transform_indices = @transform_7, window_bounds = array<i64: 8, 128>}]} {
    %c0 = arith.constant 0 : index
    %c0_0 = arith.constant 0 : index
    %0 = vector.load %arg1[%c0, %c0_0] : memref<8x32xbf16, #tpu.memory_space<vmem>>, vector<8x32xbf16>
    %c0_1 = arith.constant 0 : index
    %c0_2 = arith.constant 0 : index
    %1 = vector.load %arg2[%c0_1, %c0_2] : memref<32x512xbf16, #tpu.memory_space<vmem>>, vector<32x512xbf16>
    %cst = arith.constant dense<0.000000e+00> : vector<8x512xf32>
    %2 = tpu.matmul %0, %1, %cst {dimension_numbers = #tpu.dot_dimension_numbers<[1], [0], [0], [1], [0, 0, 1, 1], [], []>} : vector<8x32xbf16>, vector<32x512xbf16>, vector<8x512xf32> -> vector<8x512xf32>
    %c0_3 = arith.constant 0 : index
    %c0_4 = arith.constant 0 : index
    %3 = vector.load %arg3[%c0_3, %c0_4] : memref<1x512xf32, #tpu.memory_space<vmem>>, vector<1x512xf32>
    %4 = vector.broadcast %3 : vector<1x512xf32> to vector<8x512xf32>
    %5 = arith.addf %2, %4 : vector<8x512xf32>
    %6 = math.tanh %5 : vector<8x512xf32>
    %7 = arith.truncf %6 : vector<8x512xf32> to vector<8x512xbf16>
    %c0_5 = arith.constant 0 : index
    %c0_6 = arith.constant 0 : index
    %8 = vector.load %arg4[%c0_5, %c0_6] : memref<512x384xbf16, #tpu.memory_space<vmem>>, vector<512x384xbf16>
    %cst_7 = arith.constant dense<0.000000e+00> : vector<8x384xf32>
    %9 = tpu.matmul %7, %8, %cst_7 {dimension_numbers = #tpu.dot_dimension_numbers<[1], [0], [0], [1], [0, 0, 1, 1], [], []>} : vector<8x512xbf16>, vector<512x384xbf16>, vector<8x384xf32> -> vector<8x384xf32>
    %c0_8 = arith.constant 0 : index
    %c0_9 = arith.constant 0 : index
    %10 = vector.load %arg5[%c0_8, %c0_9] : memref<1x384xf32, #tpu.memory_space<vmem>>, vector<1x384xf32>
    %11 = vector.broadcast %10 : vector<1x384xf32> to vector<8x384xf32>
    %12 = arith.addf %9, %11 : vector<8x384xf32>
    %13 = math.tanh %12 : vector<8x384xf32>
    %14 = arith.truncf %13 : vector<8x384xf32> to vector<8x384xbf16>
    %c0_10 = arith.constant 0 : index
    %c0_11 = arith.constant 0 : index
    %15 = vector.load %arg6[%c0_10, %c0_11] : memref<384x128xbf16, #tpu.memory_space<vmem>>, vector<384x128xbf16>
    %cst_12 = arith.constant dense<0.000000e+00> : vector<8x128xf32>
    %16 = tpu.matmul %14, %15, %cst_12 {dimension_numbers = #tpu.dot_dimension_numbers<[1], [0], [0], [1], [0, 0, 1, 1], [], []>} : vector<8x384xbf16>, vector<384x128xbf16>, vector<8x128xf32> -> vector<8x128xf32>
    %c0_13 = arith.constant 0 : index
    %c0_14 = arith.constant 0 : index
    %17 = vector.load %arg7[%c0_13, %c0_14] : memref<1x128xf32, #tpu.memory_space<vmem>>, vector<1x128xf32>
    %18 = vector.broadcast %17 : vector<1x128xf32> to vector<8x128xf32>
    %19 = arith.addf %16, %18 : vector<8x128xf32>
    %20 = math.tanh %19 : vector<8x128xf32>
    %c0_15 = arith.constant 0 : index
    %c0_16 = arith.constant 0 : index
    %21 = vector.load %arg8[%c0_15, %c0_16] : memref<8x128xf32, #tpu.memory_space<vmem>>, vector<8x128xf32>
    tpu.vector_store %arg8[%c0_15, %c0_16], %20 {strides = array<i32>} : memref<8x128xf32, #tpu.memory_space<vmem>>, vector<8x128xf32>,
    return
  }
  func.func @transform_0(%arg0: i32) -> (i32, i32) {
    %c0_i32 = arith.constant 0 : i32
    %c0_i32_0 = arith.constant 0 : i32
    return %arg0, %c0_i32 : i32, i32
  }
  func.func @transform_1(%arg0: i32) -> (i32, i32) {
    %c0_i32 = arith.constant 0 : i32
    %c0_i32_0 = arith.constant 0 : i32
    %c0_i32_1 = arith.constant 0 : i32
    return %c0_i32, %c0_i32_0 : i32, i32
  }
  func.func @transform_2(%arg0: i32) -> (i32, i32) {
    %c0_i32 = arith.constant 0 : i32
    %c0_i32_0 = arith.constant 0 : i32
    %c0_i32_1 = arith.constant 0 : i32
    return %c0_i32, %c0_i32_0 : i32, i32
  }
  func.func @transform_3(%arg0: i32) -> (i32, i32) {
    %c0_i32 = arith.constant 0 : i32
    %c0_i32_0 = arith.constant 0 : i32
    %c0_i32_1 = arith.constant 0 : i32
    return %c0_i32, %c0_i32_0 : i32, i32
  }
  func.func @transform_4(%arg0: i32) -> (i32, i32) {
    %c0_i32 = arith.constant 0 : i32
    %c0_i32_0 = arith.constant 0 : i32
    %c0_i32_1 = arith.constant 0 : i32
    return %c0_i32, %c0_i32_0 : i32, i32
  }
  func.func @transform_5(%arg0: i32) -> (i32, i32) {
    %c0_i32 = arith.constant 0 : i32
    %c0_i32_0 = arith.constant 0 : i32
    %c0_i32_1 = arith.constant 0 : i32
    return %c0_i32, %c0_i32_0 : i32, i32
  }
  func.func @transform_6(%arg0: i32) -> (i32, i32) {
    %c0_i32 = arith.constant 0 : i32
    %c0_i32_0 = arith.constant 0 : i32
    %c0_i32_1 = arith.constant 0 : i32
    return %c0_i32, %c0_i32_0 : i32, i32
  }
  func.func @transform_7(%arg0: i32) -> (i32, i32) {
    %c0_i32 = arith.constant 0 : i32
    %c0_i32_0 = arith.constant 0 : i32
    return %arg0, %c0_i32 : i32, i32
  }
}

</mosaic_0001>

<llo_original>
// kernel: model_actor_forward.1
$region0: #{model_actor_forward.1}
  #allocation0 [shape = 'u32[]', space=smem, size = 0x4, offset = 0x4, fixed_abs, tag = 'smem constant byte address 0x4 - core index']
  #allocation1 [shape = 'u32[72,128]{1,0:T(1,128)}', space=vmem, size = 0x9000, scoped, tag = 'internal scratch']
  %s0 = inlined_call_operand.vmem [shape: bf16[8,32], index: 0, kind: input, shape index: {}]
  %s1 = inlined_call_operand.hbm [shape: bf16[32,512], index: 1, kind: input, shape index: {}]
  %s2 = inlined_call_operand.vmem [shape: f32[1,512], index: 2, kind: input, shape index: {}]
  %s3 = inlined_call_operand.hbm [shape: bf16[512,384], index: 3, kind: input, shape index: {}]
  %s4 = inlined_call_operand.vmem [shape: f32[1,384], index: 4, kind: input, shape index: {}]
  %s5 = inlined_call_operand.hbm [shape: bf16[384,128], index: 5, kind: input, shape index: {}]
  %s6 = inlined_call_operand.vmem [shape: f32[1,128], index: 6, kind: input, shape index: {}]
  %s7 = inlined_call_operand.vmem [shape: f32[8,128], index: 7, kind: output, shape index: {}]
  %s8 = sld [smem:[#allocation0]]
  $region50: #{model_actor_forward.1} parent=0
    _
  %s10 = ssub.s32 1, %s8
  %s11 = scalar_select 0, %s10, %s8
  $region1: #{model_actor_forward.1} parent=0
    #allocation2 [shape = 'u8[32768]{0}', space=vmem, size = 0x8000, scoped, tag = 'input window, operand 1, single buffered']
    #allocation3 [shape = 's32[1]{0}', space=sflag, size = 0x4, scoped, tag = 'scoped memory for model_actor_forward.1']
    #allocation4 [shape = 'u8[393216]{0}', space=vmem, size = 0x60000, scoped, tag = 'input window, operand 3, single buffered']
    #allocation5 [shape = 's32[1]{0}', space=sflag, size = 0x4, scoped, tag = 'scoped memory for model_actor_forward.1']
    #allocation6 [shape = 'u8[98304]{0}', space=vmem, size = 0x18000, scoped, tag = 'input window, operand 5, single buffered']
    %12 = vsyncpa [#allocation3], 0
    %13 = vsyncpa [#allocation5], 0
    // Predicated region
    $region2: #{model_actor_forward.1} parent=1 // pred_check
      _
    $region3: #{model_actor_forward.1} parent=1 // pred_check_branch
      %15 = sbr.rel (0) target = $region5
    $region4: #{model_actor_forward.1} parent=1 // pred_region
      _
    $region5: #{model_actor_forward.1} parent=1 // pred_fallthru
      _
    // Predicated region
    $region6: #{model_actor_forward.1} parent=1 // pred_check
      _
    $region7: #{model_actor_forward.1} parent=1 // pred_check_branch
      %17 = sbr.rel (0) target = $region9
    $region8: #{model_actor_forward.1} parent=1 // pred_region
      %19 = vsyncadd [#allocation3], 0
      %s20 = sshll.u32 %s1, 4
      %s21 = int_to_ptr.hbm [resolvable:$true] %s20
      %s22 = sshll.u32 [#allocation2], 4
      %s23 = int_to_ptr.vmem [resolvable:$true] %s22
      %28 = dma.hbm_to_vmem [thread:$0]  %s21, 1024, %s23, [#allocation3], 256, 256, 16
    $region9: #{model_actor_forward.1} parent=1 // pred_fallthru
      _
    // Predicated region
    $region10: #{model_actor_forward.1} parent=1 // pred_check
      _
    $region11: #{model_actor_forward.1} parent=1 // pred_check_branch
      %30 = sbr.rel (0) target = $region13
    $region12: #{model_actor_forward.1} parent=1 // pred_region
      _
    $region13: #{model_actor_forward.1} parent=1 // pred_fallthru
      _
    // Predicated region
    $region14: #{model_actor_forward.1} parent=1 // pred_check
      _
    $region15: #{model_actor_forward.1} parent=1 // pred_check_branch
      %32 = sbr.rel (0) target = $region17
    $region16: #{model_actor_forward.1} parent=1 // pred_region
      %34 = vsyncadd [#allocation5], 0
      %s35 = sshll.u32 %s3, 4
      %s36 = int_to_ptr.hbm [resolvable:$true] %s35
      %s37 = sshll.u32 [#allocation4], 4
      %s38 = int_to_ptr.vmem [resolvable:$true] %s37
      %43 = dma.hbm_to_vmem [thread:$0]  %s36, 12288, %s38, [#allocation5], 192, 192, 12
    $region17: #{model_actor_forward.1} parent=1 // pred_fallthru
      _
    // Predicated region
    $region18: #{model_actor_forward.1} parent=1 // pred_check
      _
    $region19: #{model_actor_forward.1} parent=1 // pred_check_branch
      %45 = sbr.rel (0) target = $region21
    $region20: #{model_actor_forward.1} parent=1 // pred_region
      _
    $region21: #{model_actor_forward.1} parent=1 // pred_fallthru
      _
    // Predicated region
    $region22: #{model_actor_forward.1} parent=1 // pred_check
      _
    $region23: #{model_actor_forward.1} parent=1 // pred_check_branch
      %47 = sbr.rel (0) target = $region25
    $region24: #{model_actor_forward.1} parent=1 // pred_region
      %49 = vsyncadd [#allocation5], 0
      %s50 = sshll.u32 %s5, 4
      %s51 = int_to_ptr.hbm [resolvable:$true] %s50
      %s52 = sshll.u32 [#allocation6], 4
      %s53 = int_to_ptr.vmem [resolvable:$true] %s52
      %58 = dma.hbm_to_vmem [thread:$0]  %s51, 3072, %s53, [#allocation5], 64, 64, 4
    $region25: #{model_actor_forward.1} parent=1 // pred_fallthru
      _
    // Predicated region
    $region26: #{model_actor_forward.1} parent=1 // pred_check
      _
    $region27: #{model_actor_forward.1} parent=1 // pred_check_branch
      %60 = sbr.rel (0) target = $region29
    $region28: #{model_actor_forward.1} parent=1 // pred_region
      _
    $region29: #{model_actor_forward.1} parent=1 // pred_fallthru
      _
    // Predicated region
    $region30: #{model_actor_forward.1} parent=1 // pred_check
      _
    $region31: #{model_actor_forward.1} parent=1 // pred_check_branch
      %62 = sbr.rel (0) target = $region33
    $region32: #{model_actor_forward.1} parent=1 // pred_region
      %64 = dma.done [#allocation3], 1024
    $region33: #{model_actor_forward.1} parent=1 // pred_fallthru
      _
    // Predicated region
    $region34: #{model_actor_forward.1} parent=1 // pred_check
      _
    $region35: #{model_actor_forward.1} parent=1 // pred_check_branch
      %66 = sbr.rel (0) target = $region37
    $region36: #{model_actor_forward.1} parent=1 // pred_region
      %68 = dma.done [#allocation5], 12288
    $region37: #{model_actor_forward.1} parent=1 // pred_fallthru
      _
    // Predicated region
    $region38: #{model_actor_forward.1} parent=1 // pred_check
      _
    $region39: #{model_actor_forward.1} parent=1 // pred_check_branch
      %70 = sbr.rel (0) target = $region41
    $region40: #{model_actor_forward.1} parent=1 // pred_region
      %72 = dma.done [#allocation5], 3072
    $region41: #{model_actor_forward.1} parent=1 // pred_fallthru
      _
    %v74 = vld [vmem:[%s0] sm:$0xf]
    %v75 = vld [vmem:[#allocation2] sm:$0xff]
    %v76 = vld [vmem:[#allocation2 + $0x8] sm:$0xff]
    %v77 = vld [vmem:[#allocation2 + $0x10] sm:$0xff]
    %v78 = vld [vmem:[#allocation2 + $0x18] sm:$0xff]
    %v79 = vld [vmem:[#allocation2 + $0x20] sm:$0xff]
    %v80 = vld [vmem:[#allocation2 + $0x28] sm:$0xff]
    %v81 = vld [vmem:[#allocation2 + $0x30] sm:$0xff]
    %v82 = vld [vmem:[#allocation2 + $0x38] sm:$0xff]
    %v83 = vld [vmem:[%s2] sm:$0xf]
    %v85 = vperm.slane %v83, 0
    %v86 = vperm.slane %v83, 1
    %v87 = vperm.slane %v83, 2
    %v88 = vperm.slane %v83, 3
    %v101 = vunpack.c.l.b16 %v75
    %v102 = vunpack.c.h.b16 %v75
    %v103 = vunpack.c.l.b16 %v76
    %v104 = vunpack.c.h.b16 %v76
    %v105 = vunpack.c.l.b16 %v77
    %v106 = vunpack.c.h.b16 %v77
    %v107 = vunpack.c.l.b16 %v78
    %v108 = vunpack.c.h.b16 %v78
    %v109 = vunpack.c.l.b16 %v79
    %v110 = vunpack.c.h.b16 %v79
    %v111 = vunpack.c.l.b16 %v80
    %v112 = vunpack.c.h.b16 %v80
    %v113 = vunpack.c.l.b16 %v81
    %v114 = vunpack.c.h.b16 %v81
    %v115 = vunpack.c.l.b16 %v82
    %v116 = vunpack.c.h.b16 %v82
    %v117 = vpack.c.b16 %v105, %v101
    %v118 = vpack.c.b16 %v106, %v102
    %v119 = vpack.c.b16 %v107, %v103
    %v120 = vpack.c.b16 %v108, %v104
    %v121 = vpack.c.b16 %v113, %v109
    %v122 = vpack.c.b16 %v114, %v110
    %v123 = vpack.c.b16 %v115, %v111
    %v124 = vpack.c.b16 %v116, %v112
    %vm133 = vcmask 261120
    %v135 = vsel %vm133, %v74, 0
    %137 = vmatpush.bf16.msra.mxu0 0
    %138 = vmatpush.bf16.msra.mxu0 0
    %139 = vmatpush.bf16.msra.mxu0 0
    %140 = vmatpush.bf16.msra.mxu0 0
    %141 = vmatpush.bf16.msra.mxu0 0
    %142 = vmatpush.bf16.msra.mxu0 0
    %143 = vmatpush.bf16.msra.mxu0 %v121
    %144 = vmatpush.bf16.msra.mxu0 %v117
    %145 = vmatmul.bf16.gmra.mxu0 %v135
    %v146 = vpop.f32.mrf.mxu0
    %v147 = vadd.f32 %v85, %v146
    %v148 = vpop.f32.mrf.mxu0
    %149 = vdwg.mxu0
    %150 = vmatpush.bf16.msra.mxu0 0
    %151 = vmatpush.bf16.msra.mxu0 0
    %152 = vmatpush.bf16.msra.mxu0 0
    %153 = vmatpush.bf16.msra.mxu0 0
    %154 = vmatpush.bf16.msra.mxu0 0
    %155 = vmatpush.bf16.msra.mxu0 0
    %156 = vmatpush.bf16.msra.mxu0 %v122
    %157 = vmatpush.bf16.msra.mxu0 %v118
    %158 = vmatmul.bf16.gmra.mxu0 %v135
    %v159 = vpop.f32.mrf.mxu0
    %v160 = vadd.f32 %v86, %v159
    %v161 = vpop.f32.mrf.mxu0
    %162 = vdwg.mxu0
    %163 = vmatpush.bf16.msra.mxu0 0
    %164 = vmatpush.bf16.msra.mxu0 0
    %165 = vmatpush.bf16.msra.mxu0 0
    %166 = vmatpush.bf16.msra.mxu0 0
    %167 = vmatpush.bf16.msra.mxu0 0
    %168 = vmatpush.bf16.msra.mxu0 0
    %169 = vmatpush.bf16.msra.mxu0 %v123
    %170 = vmatpush.bf16.msra.mxu0 %v119
    %171 = vmatmul.bf16.gmra.mxu0 %v135
    %v172 = vpop.f32.mrf.mxu0
    %v173 = vadd.f32 %v87, %v172
    %v174 = vpop.f32.mrf.mxu0
    %175 = vdwg.mxu0
    %176 = vmatpush.bf16.msra.mxu0 0
    %177 = vmatpush.bf16.msra.mxu0 0
    %178 = vmatpush.bf16.msra.mxu0 0
    %179 = vmatpush.bf16.msra.mxu0 0
    %180 = vmatpush.bf16.msra.mxu0 0
    %181 = vmatpush.bf16.msra.mxu0 0
    %182 = vmatpush.bf16.msra.mxu0 %v124
    %183 = vmatpush.bf16.msra.mxu0 %v120
    %184 = vmatmul.bf16.gmra.mxu0 %v135
    %v185 = vpop.f32.mrf.mxu0
    %v186 = vadd.f32 %v88, %v185
    %v187 = vpop.f32.mrf.mxu0
    %188 = vdwg.mxu0
    %v189 = vtanh.pop %v147
    %v190 = vtanh.pop %v160
    %v191 = vtanh.pop %v173
    %v192 = vtanh.pop %v186
    %v193 = vpack.c.bf16 %v189, %v189
    %v194 = vpack.c.bf16 %v190, %v190
    %v195 = vpack.c.bf16 %v191, %v191
    %v196 = vpack.c.bf16 %v192, %v192
    %v197 = vld [vmem:[#allocation4] sm:$0xff]
    %v198 = vld [vmem:[#allocation4 + $0x8] sm:$0xf]
    %v199 = vld [vmem:[#allocation4 + $0xc] sm:$0xff]
    %v200 = vld [vmem:[#allocation4 + $0x14] sm:$0xf]
    %v201 = vld [vmem:[#allocation4 + $0x18] sm:$0xff]
    %v202 = vld [vmem:[#allocation4 + $0x20] sm:$0xf]
    %v203 = vld [vmem:[#allocation4 + $0x24] sm:$0xff]
    %v204 = vld [vmem:[#allocation4 + $0x2c] sm:$0xf]
    %v205 = vld [vmem:[#allocation4 + $0x30] sm:$0xff]
    %v206 = vld [vmem:[#allocation4 + $0x38] sm:$0xf]
    %v207 = vld [vmem:[#allocation4 + $0x3c] sm:$0xff]
    %v208 = vld [vmem:[#allocation4 + $0x44] sm:$0xf]
    %v209 = vld [vmem:[#allocation4 + $0x48] sm:$0xff]
    %v210 = vld [vmem:[#allocation4 + $0x50] sm:$0xf]
    %v211 = vld [vmem:[#allocation4 + $0x54] sm:$0xff]
    %v212 = vld [vmem:[#allocation4 + $0x5c] sm:$0xf]
    %v213 = vld [vmem:[#allocation4 + $0x60] sm:$0xff]
    %v214 = vld [vmem:[#allocation4 + $0x68] sm:$0xf]
    %v215 = vld [vmem:[#allocation4 + $0x6c] sm:$0xff]
    %v216 = vld [vmem:[#allocation4 + $0x74] sm:$0xf]
    %v217 = vld [vmem:[#allocation4 + $0x78] sm:$0xff]
    %v218 = vld [vmem:[#allocation4 + $0x80] sm:$0xf]
    %v219 = vld [vmem:[#allocation4 + $0x84] sm:$0xff]
    %v220 = vld [vmem:[#allocation4 + $0x8c] sm:$0xf]
    %v221 = vld [vmem:[#allocation4 + $0x90] sm:$0xff]
    %v222 = vld [vmem:[#allocation4 + $0x98] sm:$0xf]
    %v223 = vld [vmem:[#allocation4 + $0x9c] sm:$0xff]
    %v224 = vld [vmem:[#allocation4 + $0xa4] sm:$0xf]
    %v225 = vld [vmem:[#allocation4 + $0xa8] sm:$0xff]
    %v226 = vld [vmem:[#allocation4 + $0xb0] sm:$0xf]
    %v227 = vld [vmem:[#allocation4 + $0xb4] sm:$0xff]
    %v228 = vld [vmem:[#allocation4 + $0xbc] sm:$0xf]
    %v229 = vld [vmem:[#allocation4 + $0xc0] sm:$0xff]
    %v230 = vld [vmem:[#allocation4 + $0xc8] sm:$0xf]
    %v231 = vld [vmem:[#allocation4 + $0xcc] sm:$0xff]
    %v232 = vld [vmem:[#allocation4 + $0xd4] sm:$0xf]
    %v233 = vld [vmem:[#allocation4 + $0xd8] sm:$0xff]
    %v234 = vld [vmem:[#allocation4 + $0xe0] sm:$0xf]
    %v235 = vld [vmem:[#allocation4 + $0xe4] sm:$0xff]
    %v236 = vld [vmem:[#allocation4 + $0xec] sm:$0xf]
    %v237 = vld [vmem:[#allocation4 + $0xf0] sm:$0xff]
    %v238 = vld [vmem:[#allocation4 + $0xf8] sm:$0xf]
    %v239 = vld [vmem:[#allocation4 + $0xfc] sm:$0xff]
    %v240 = vld [vmem:[#allocation4 + $0x104] sm:$0xf]
    %v241 = vld [vmem:[#allocation4 + $0x108] sm:$0xff]
    %v242 = vld [vmem:[#allocation4 + $0x110] sm:$0xf]
    %v243 = vld [vmem:[#allocation4 + $0x114] sm:$0xff]
    %v244 = vld [vmem:[#allocation4 + $0x11c] sm:$0xf]
    %v245 = vld [vmem:[#allocation4 + $0x120] sm:$0xff]
    %v246 = vld [vmem:[#allocation4 + $0x128] sm:$0xf]
    %v247 = vld [vmem:[#allocation4 + $0x12c] sm:$0xff]
    %v248 = vld [vmem:[#allocation4 + $0x134] sm:$0xf]
    %v249 = vld [vmem:[#allocation4 + $0x138] sm:$0xff]
    %v250 = vld [vmem:[#allocation4 + $0x140] sm:$0xf]
    %v251 = vld [vmem:[#allocation4 + $0x144] sm:$0xff]
    %v252 = vld [vmem:[#allocation4 + $0x14c] sm:$0xf]
    %v253 = vld [vmem:[#allocation4 + $0x150] sm:$0xff]
    %v254 = vld [vmem:[#allocation4 + $0x158] sm:$0xf]
    %v255 = vld [vmem:[#allocation4 + $0x15c] sm:$0xff]
    %v256 = vld [vmem:[#allocation4 + $0x164] sm:$0xf]
    %v257 = vld [vmem:[#allocation4 + $0x168] sm:$0xff]
    %v258 = vld [vmem:[#allocation4 + $0x170] sm:$0xf]
    %v259 = vld [vmem:[#allocation4 + $0x174] sm:$0xff]
    %v260 = vld [vmem:[#allocation4 + $0x17c] sm:$0xf]
    %v261 = vld [vmem:[#allocation4 + $0x180] sm:$0xff]
    %v262 = vld [vmem:[#allocation4 + $0x188] sm:$0xf]
    %v263 = vld [vmem:[#allocation4 + $0x18c] sm:$0xff]
    %v264 = vld [vmem:[#allocation4 + $0x194] sm:$0xf]
    %v265 = vld [vmem:[#allocation4 + $0x198] sm:$0xff]
    %v266 = vld [vmem:[#allocation4 + $0x1a0] sm:$0xf]
    %v267 = vld [vmem:[#allocation4 + $0x1a4] sm:$0xff]
    %v268 = vld [vmem:[#allocation4 + $0x1ac] sm:$0xf]
    %v269 = vld [vmem:[#allocation4 + $0x1b0] sm:$0xff]
    %v270 = vld [vmem:[#allocation4 + $0x1b8] sm:$0xf]
    %v271 = vld [vmem:[#allocation4 + $0x1bc] sm:$0xff]
    %v272 = vld [vmem:[#allocation4 + $0x1c4] sm:$0xf]
    %v273 = vld [vmem:[#allocation4 + $0x1c8] sm:$0xff]
    %v274 = vld [vmem:[#allocation4 + $0x1d0] sm:$0xf]
    %v275 = vld [vmem:[#allocation4 + $0x1d4] sm:$0xff]
    %v276 = vld [vmem:[#allocation4 + $0x1dc] sm:$0xf]
    %v277 = vld [vmem:[#allocation4 + $0x1e0] sm:$0xff]
    %v278 = vld [vmem:[#allocation4 + $0x1e8] sm:$0xf]
    %v279 = vld [vmem:[#allocation4 + $0x1ec] sm:$0xff]
    %v280 = vld [vmem:[#allocation4 + $0x1f4] sm:$0xf]
    %v281 = vld [vmem:[#allocation4 + $0x1f8] sm:$0xff]
    %v282 = vld [vmem:[#allocation4 + $0x200] sm:$0xf]
    %v283 = vld [vmem:[#allocation4 + $0x204] sm:$0xff]
    %v284 = vld [vmem:[#allocation4 + $0x20c] sm:$0xf]
    %v285 = vld [vmem:[#allocation4 + $0x210] sm:$0xff]
    %v286 = vld [vmem:[#allocation4 + $0x218] sm:$0xf]
    %v287 = vld [vmem:[#allocation4 + $0x21c] sm:$0xff]
    %v288 = vld [vmem:[#allocation4 + $0x224] sm:$0xf]
    %v289 = vld [vmem:[#allocation4 + $0x228] sm:$0xff]
    %v290 = vld [vmem:[#allocation4 + $0x230] sm:$0xf]
    %v291 = vld [vmem:[#allocation4 + $0x234] sm:$0xff]
    %v292 = vld [vmem:[#allocation4 + $0x23c] sm:$0xf]
    %v293 = vld [vmem:[#allocation4 + $0x240] sm:$0xff]
    %v294 = vld [vmem:[#allocation4 + $0x248] sm:$0xf]
    %v295 = vld [vmem:[#allocation4 + $0x24c] sm:$0xff]
    %v296 = vld [vmem:[#allocation4 + $0x254] sm:$0xf]
    %v297 = vld [vmem:[#allocation4 + $0x258] sm:$0xff]
    %v298 = vld [vmem:[#allocation4 + $0x260] sm:$0xf]
    %v299 = vld [vmem:[#allocation4 + $0x264] sm:$0xff]
    %v300 = vld [vmem:[#allocation4 + $0x26c] sm:$0xf]
    %v301 = vld [vmem:[#allocation4 + $0x270] sm:$0xff]
    %v302 = vld [vmem:[#allocation4 + $0x278] sm:$0xf]
    %v303 = vld [vmem:[#allocation4 + $0x27c] sm:$0xff]
    %v304 = vld [vmem:[#allocation4 + $0x284] sm:$0xf]
    %v305 = vld [vmem:[#allocation4 + $0x288] sm:$0xff]
    %v306 = vld [vmem:[#allocation4 + $0x290] sm:$0xf]
    %v307 = vld [vmem:[#allocation4 + $0x294] sm:$0xff]
    %v308 = vld [vmem:[#allocation4 + $0x29c] sm:$0xf]
    %v309 = vld [vmem:[#allocation4 + $0x2a0] sm:$0xff]
    %v310 = vld [vmem:[#allocation4 + $0x2a8] sm:$0xf]
    %v311 = vld [vmem:[#allocation4 + $0x2ac] sm:$0xff]
    %v312 = vld [vmem:[#allocation4 + $0x2b4] sm:$0xf]
    %v313 = vld [vmem:[#allocation4 + $0x2b8] sm:$0xff]
    %v314 = vld [vmem:[#allocation4 + $0x2c0] sm:$0xf]
    %v315 = vld [vmem:[#allocation4 + $0x2c4] sm:$0xff]
    %v316 = vld [vmem:[#allocation4 + $0x2cc] sm:$0xf]
    %v317 = vld [vmem:[#allocation4 + $0x2d0] sm:$0xff]
    %v318 = vld [vmem:[#allocation4 + $0x2d8] sm:$0xf]
    %v319 = vld [vmem:[#allocation4 + $0x2dc] sm:$0xff]
    %v320 = vld [vmem:[#allocation4 + $0x2e4] sm:$0xf]
    %v321 = vld [vmem:[#allocation4 + $0x2e8] sm:$0xff]
    %v322 = vld [vmem:[#allocation4 + $0x2f0] sm:$0xf]
    %v323 = vld [vmem:[#allocation4 + $0x2f4] sm:$0xff]
    %v324 = vld [vmem:[#allocation4 + $0x2fc] sm:$0xf]
    %v325 = vld [vmem:[%s4] sm:$0x7]
    %v327 = vperm.slane %v325, 0
    %v328 = vperm.slane %v325, 1
    %v329 = vperm.slane %v325, 2
    %v461 = vunpack.c.l.b16 %v197
    %v462 = vunpack.c.h.b16 %v197
    %v463 = vunpack.c.l.b16 %v198
    %v464 = vunpack.c.l.b16 %v199
    %v465 = vunpack.c.h.b16 %v199
    %v466 = vunpack.c.l.b16 %v200
    %v467 = vunpack.c.l.b16 %v201
    %v468 = vunpack.c.h.b16 %v201
    %v469 = vunpack.c.l.b16 %v202
    %v470 = vunpack.c.l.b16 %v203
    %v471 = vunpack.c.h.b16 %v203
    %v472 = vunpack.c.l.b16 %v204
    %v473 = vunpack.c.l.b16 %v205
    %v474 = vunpack.c.h.b16 %v205
    %v475 = vunpack.c.l.b16 %v206
    %v476 = vunpack.c.l.b16 %v207
    %v477 = vunpack.c.h.b16 %v207
    %v478 = vunpack.c.l.b16 %v208
    %v479 = vunpack.c.l.b16 %v209
    %v480 = vunpack.c.h.b16 %v209
    %v481 = vunpack.c.l.b16 %v210
    %v482 = vunpack.c.l.b16 %v211
    %v483 = vunpack.c.h.b16 %v211
    %v484 = vunpack.c.l.b16 %v212
    %v485 = vunpack.c.l.b16 %v213
    %v486 = vunpack.c.h.b16 %v213
    %v487 = vunpack.c.l.b16 %v214
    %v488 = vunpack.c.l.b16 %v215
    %v489 = vunpack.c.h.b16 %v215
    %v490 = vunpack.c.l.b16 %v216
    %v491 = vunpack.c.l.b16 %v217
    %v492 = vunpack.c.h.b16 %v217
    %v493 = vunpack.c.l.b16 %v218
    %v494 = vunpack.c.l.b16 %v219
    %v495 = vunpack.c.h.b16 %v219
    %v496 = vunpack.c.l.b16 %v220
    %v497 = vunpack.c.l.b16 %v221
    %v498 = vunpack.c.h.b16 %v221
    %v499 = vunpack.c.l.b16 %v222
    %v500 = vunpack.c.l.b16 %v223
    %v501 = vunpack.c.h.b16 %v223
    %v502 = vunpack.c.l.b16 %v224
    %v503 = vunpack.c.l.b16 %v225
    %v504 = vunpack.c.h.b16 %v225
    %v505 = vunpack.c.l.b16 %v226
    %v506 = vunpack.c.l.b16 %v227
    %v507 = vunpack.c.h.b16 %v227
    %v508 = vunpack.c.l.b16 %v228
    %v509 = vunpack.c.l.b16 %v229
    %v510 = vunpack.c.h.b16 %v229
    %v511 = vunpack.c.l.b16 %v230
    %v512 = vunpack.c.l.b16 %v231
    %v513 = vunpack.c.h.b16 %v231
    %v514 = vunpack.c.l.b16 %v232
    %v515 = vunpack.c.l.b16 %v233
    %v516 = vunpack.c.h.b16 %v233
    %v517 = vunpack.c.l.b16 %v234
    %v518 = vunpack.c.l.b16 %v235
    %v519 = vunpack.c.h.b16 %v235
    %v520 = vunpack.c.l.b16 %v236
    %v521 = vunpack.c.l.b16 %v237
    %v522 = vunpack.c.h.b16 %v237
    %v523 = vunpack.c.l.b16 %v238
    %v524 = vunpack.c.l.b16 %v239
    %v525 = vunpack.c.h.b16 %v239
    %v526 = vunpack.c.l.b16 %v240
    %v527 = vunpack.c.l.b16 %v241
    %v528 = vunpack.c.h.b16 %v241
    %v529 = vunpack.c.l.b16 %v242
    %v530 = vunpack.c.l.b16 %v243
    %v531 = vunpack.c.h.b16 %v243
    %v532 = vunpack.c.l.b16 %v244
    %v533 = vunpack.c.l.b16 %v245
    %v534 = vunpack.c.h.b16 %v245
    %v535 = vunpack.c.l.b16 %v246
    %v536 = vunpack.c.l.b16 %v247
    %v537 = vunpack.c.h.b16 %v247
    %v538 = vunpack.c.l.b16 %v248
    %v539 = vunpack.c.l.b16 %v249
    %v540 = vunpack.c.h.b16 %v249
    %v541 = vunpack.c.l.b16 %v250
    %v542 = vunpack.c.l.b16 %v251
    %v543 = vunpack.c.h.b16 %v251
    %v544 = vunpack.c.l.b16 %v252
    %v545 = vunpack.c.l.b16 %v253
    %v546 = vunpack.c.h.b16 %v253
    %v547 = vunpack.c.l.b16 %v254
    %v548 = vunpack.c.l.b16 %v255
    %v549 = vunpack.c.h.b16 %v255
    %v550 = vunpack.c.l.b16 %v256
    %v551 = vunpack.c.l.b16 %v257
    %v552 = vunpack.c.h.b16 %v257
    %v553 = vunpack.c.l.b16 %v258
    %v554 = vunpack.c.l.b16 %v259
    %v555 = vunpack.c.h.b16 %v259
    %v556 = vunpack.c.l.b16 %v260
    %v557 = vunpack.c.l.b16 %v261
    %v558 = vunpack.c.h.b16 %v261
    %v559 = vunpack.c.l.b16 %v262
    %v560 = vunpack.c.l.b16 %v263
    %v561 = vunpack.c.h.b16 %v263
    %v562 = vunpack.c.l.b16 %v264
    %v563 = vunpack.c.l.b16 %v265
    %v564 = vunpack.c.h.b16 %v265
    %v565 = vunpack.c.l.b16 %v266
    %v566 = vunpack.c.l.b16 %v267
    %v567 = vunpack.c.h.b16 %v267
    %v568 = vunpack.c.l.b16 %v268
    %v569 = vunpack.c.l.b16 %v269
    %v570 = vunpack.c.h.b16 %v269
    %v571 = vunpack.c.l.b16 %v270
    %v572 = vunpack.c.l.b16 %v271
    %v573 = vunpack.c.h.b16 %v271
    %v574 = vunpack.c.l.b16 %v272
    %v575 = vunpack.c.l.b16 %v273
    %v576 = vunpack.c.h.b16 %v273
    %v577 = vunpack.c.l.b16 %v274
    %v578 = vunpack.c.l.b16 %v275
    %v579 = vunpack.c.h.b16 %v275
    %v580 = vunpack.c.l.b16 %v276
    %v581 = vunpack.c.l.b16 %v277
    %v582 = vunpack.c.h.b16 %v277
    %v583 = vunpack.c.l.b16 %v278
    %v584 = vunpack.c.l.b16 %v279
    %v585 = vunpack.c.h.b16 %v279
    %v586 = vunpack.c.l.b16 %v280
    %v587 = vunpack.c.l.b16 %v281
    %v588 = vunpack.c.h.b16 %v281
    %v589 = vunpack.c.l.b16 %v282
    %v590 = vunpack.c.l.b16 %v283
    %v591 = vunpack.c.h.b16 %v283
    %v592 = vunpack.c.l.b16 %v284
    %v593 = vunpack.c.l.b16 %v285
    %v594 = vunpack.c.h.b16 %v285
    %v595 = vunpack.c.l.b16 %v286
    %v596 = vunpack.c.l.b16 %v287
    %v597 = vunpack.c.h.b16 %v287
    %v598 = vunpack.c.l.b16 %v288
    %v599 = vunpack.c.l.b16 %v289
    %v600 = vunpack.c.h.b16 %v289
    %v601 = vunpack.c.l.b16 %v290
    %v602 = vunpack.c.l.b16 %v291
    %v603 = vunpack.c.h.b16 %v291
    %v604 = vunpack.c.l.b16 %v292
    %v605 = vunpack.c.l.b16 %v293
    %v606 = vunpack.c.h.b16 %v293
    %v607 = vunpack.c.l.b16 %v294
    %v608 = vunpack.c.l.b16 %v295
    %v609 = vunpack.c.h.b16 %v295
    %v610 = vunpack.c.l.b16 %v296
    %v611 = vunpack.c.l.b16 %v297
    %v612 = vunpack.c.h.b16 %v297
    %v613 = vunpack.c.l.b16 %v298
    %v614 = vunpack.c.l.b16 %v299
    %v615 = vunpack.c.h.b16 %v299
    %v616 = vunpack.c.l.b16 %v300
    %v617 = vunpack.c.l.b16 %v301
    %v618 = vunpack.c.h.b16 %v301
    %v619 = vunpack.c.l.b16 %v302
    %v620 = vunpack.c.l.b16 %v303
    %v621 = vunpack.c.h.b16 %v303
    %v622 = vunpack.c.l.b16 %v304
    %v623 = vunpack.c.l.b16 %v305
    %v624 = vunpack.c.h.b16 %v305
    %v625 = vunpack.c.l.b16 %v306
    %v626 = vunpack.c.l.b16 %v307
    %v627 = vunpack.c.h.b16 %v307
    %v628 = vunpack.c.l.b16 %v308
    %v629 = vunpack.c.l.b16 %v309
    %v630 = vunpack.c.h.b16 %v309
    %v631 = vunpack.c.l.b16 %v310
    %v632 = vunpack.c.l.b16 %v311
    %v633 = vunpack.c.h.b16 %v311
    %v634 = vunpack.c.l.b16 %v312
    %v635 = vunpack.c.l.b16 %v313
    %v636 = vunpack.c.h.b16 %v313
    %v637 = vunpack.c.l.b16 %v314
    %v638 = vunpack.c.l.b16 %v315
    %v639 = vunpack.c.h.b16 %v315
    %v640 = vunpack.c.l.b16 %v316
    %v641 = vunpack.c.l.b16 %v317
    %v642 = vunpack.c.h.b16 %v317
    %v643 = vunpack.c.l.b16 %v318
    %v644 = vunpack.c.l.b16 %v319
    %v645 = vunpack.c.h.b16 %v319
    %v646 = vunpack.c.l.b16 %v320
    %v647 = vunpack.c.l.b16 %v321
    %v648 = vunpack.c.h.b16 %v321
    %v649 = vunpack.c.l.b16 %v322
    %v650 = vunpack.c.l.b16 %v323
    %v651 = vunpack.c.h.b16 %v323
    %v652 = vunpack.c.l.b16 %v324
    %v653 = vpack.c.b16 %v464, %v461
    %v654 = vpack.c.b16 %v465, %v462
    %v655 = vpack.c.b16 %v466, %v463
    %v656 = vpack.c.b16 %v470, %v467
    %v657 = vpack.c.b16 %v471, %v468
    %v658 = vpack.c.b16 %v472, %v469
    %v659 = vpack.c.b16 %v476, %v473
    %v660 = vpack.c.b16 %v477, %v474
    %v661 = vpack.c.b16 %v478, %v475
    %v662 = vpack.c.b16 %v482, %v479
    %v663 = vpack.c.b16 %v483, %v480
    %v664 = vpack.c.b16 %v484, %v481
    %v665 = vpack.c.b16 %v488, %v485
    %v666 = vpack.c.b16 %v489, %v486
    %v667 = vpack.c.b16 %v490, %v487
    %v668 = vpack.c.b16 %v494, %v491
    %v669 = vpack.c.b16 %v495, %v492
    %v670 = vpack.c.b16 %v496, %v493
    %v671 = vpack.c.b16 %v500, %v497
    %v672 = vpack.c.b16 %v501, %v498
    %v673 = vpack.c.b16 %v502, %v499
    %v674 = vpack.c.b16 %v506, %v503
    %v675 = vpack.c.b16 %v507, %v504
    %v676 = vpack.c.b16 %v508, %v505
    %v677 = vpack.c.b16 %v512, %v509
    %v678 = vpack.c.b16 %v513, %v510
    %v679 = vpack.c.b16 %v514, %v511
    %v680 = vpack.c.b16 %v518, %v515
    %v681 = vpack.c.b16 %v519, %v516
    %v682 = vpack.c.b16 %v520, %v517
    %v683 = vpack.c.b16 %v524, %v521
    %v684 = vpack.c.b16 %v525, %v522
    %v685 = vpack.c.b16 %v526, %v523
    %v686 = vpack.c.b16 %v530, %v527
    %v687 = vpack.c.b16 %v531, %v528
    %v688 = vpack.c.b16 %v532, %v529
    %v689 = vpack.c.b16 %v536, %v533
    %v690 = vpack.c.b16 %v537, %v534
    %v691 = vpack.c.b16 %v538, %v535
    %v692 = vpack.c.b16 %v542, %v539
    %v693 = vpack.c.b16 %v543, %v540
    %v694 = vpack.c.b16 %v544, %v541
    %v695 = vpack.c.b16 %v548, %v545
    %v696 = vpack.c.b16 %v549, %v546
    %v697 = vpack.c.b16 %v550, %v547
    %v698 = vpack.c.b16 %v554, %v551
    %v699 = vpack.c.b16 %v555, %v552
    %v700 = vpack.c.b16 %v556, %v553
    %v701 = vpack.c.b16 %v560, %v557
    %v702 = vpack.c.b16 %v561, %v558
    %v703 = vpack.c.b16 %v562, %v559
    %v704 = vpack.c.b16 %v566, %v563
    %v705 = vpack.c.b16 %v567, %v564
    %v706 = vpack.c.b16 %v568, %v565
    %v707 = vpack.c.b16 %v572, %v569
    %v708 = vpack.c.b16 %v573, %v570
    %v709 = vpack.c.b16 %v574, %v571
    %v710 = vpack.c.b16 %v578, %v575
    %v711 = vpack.c.b16 %v579, %v576
    %v712 = vpack.c.b16 %v580, %v577
    %v713 = vpack.c.b16 %v584, %v581
    %v714 = vpack.c.b16 %v585, %v582
    %v715 = vpack.c.b16 %v586, %v583
    %v716 = vpack.c.b16 %v590, %v587
    %v717 = vpack.c.b16 %v591, %v588
    %v718 = vpack.c.b16 %v592, %v589
    %v719 = vpack.c.b16 %v596, %v593
    %v720 = vpack.c.b16 %v597, %v594
    %v721 = vpack.c.b16 %v598, %v595
    %v722 = vpack.c.b16 %v602, %v599
    %v723 = vpack.c.b16 %v603, %v600
    %v724 = vpack.c.b16 %v604, %v601
    %v725 = vpack.c.b16 %v608, %v605
    %v726 = vpack.c.b16 %v609, %v606
    %v727 = vpack.c.b16 %v610, %v607
    %v728 = vpack.c.b16 %v614, %v611
    %v729 = vpack.c.b16 %v615, %v612
    %v730 = vpack.c.b16 %v616, %v613
    %v731 = vpack.c.b16 %v620, %v617
    %v732 = vpack.c.b16 %v621, %v618
    %v733 = vpack.c.b16 %v622, %v619
    %v734 = vpack.c.b16 %v626, %v623
    %v735 = vpack.c.b16 %v627, %v624
    %v736 = vpack.c.b16 %v628, %v625
    %v737 = vpack.c.b16 %v632, %v629
    %v738 = vpack.c.b16 %v633, %v630
    %v739 = vpack.c.b16 %v634, %v631
    %v740 = vpack.c.b16 %v638, %v635
    %v741 = vpack.c.b16 %v639, %v636
    %v742 = vpack.c.b16 %v640, %v637
    %v743 = vpack.c.b16 %v644, %v641
    %v744 = vpack.c.b16 %v645, %v642
    %v745 = vpack.c.b16 %v646, %v643
    %v746 = vpack.c.b16 %v650, %v647
    %v747 = vpack.c.b16 %v651, %v648
    %v748 = vpack.c.b16 %v652, %v649
    %845 = vmatpush.bf16.msra.mxu0 %v674
    %846 = vmatpush.bf16.msra.mxu0 %v671
    %847 = vmatpush.bf16.msra.mxu0 %v668
    %848 = vmatpush.bf16.msra.mxu0 %v665
    %849 = vmatpush.bf16.msra.mxu0 %v662
    %850 = vmatpush.bf16.msra.mxu0 %v659
    %851 = vmatpush.bf16.msra.mxu0 %v656
    %852 = vmatpush.bf16.msra.mxu0 %v653
    %853 = vmatmul.bf16.gmra.mxu0 %v193
    %v854 = vpop.f32.mrf.mxu0
    %v855 = vadd.f32 %v327, %v854
    %v856 = vpop.f32.mrf.mxu0
    %857 = vdwg.mxu0
    %858 = vmatpush.bf16.msra.mxu0 %v698
    %859 = vmatpush.bf16.msra.mxu0 %v695
    %860 = vmatpush.bf16.msra.mxu0 %v692
    %861 = vmatpush.bf16.msra.mxu0 %v689
    %862 = vmatpush.bf16.msra.mxu0 %v686
    %863 = vmatpush.bf16.msra.mxu0 %v683
    %864 = vmatpush.bf16.msra.mxu0 %v680
    %865 = vmatpush.bf16.msra.mxu0 %v677
    %866 = vmatmul.bf16.gmra.mxu0 %v194
    %v867 = vpop.f32.mrf.mxu0
    %v868 = vadd.f32 %v855, %v867
    %v869 = vpop.f32.mrf.mxu0
    %870 = vdwg.mxu0
    %871 = vmatpush.bf16.msra.mxu0 %v722
    %872 = vmatpush.bf16.msra.mxu0 %v719
    %873 = vmatpush.bf16.msra.mxu0 %v716
    %874 = vmatpush.bf16.msra.mxu0 %v713
    %875 = vmatpush.bf16.msra.mxu0 %v710
    %876 = vmatpush.bf16.msra.mxu0 %v707
    %877 = vmatpush.bf16.msra.mxu0 %v704
    %878 = vmatpush.bf16.msra.mxu0 %v701
    %879 = vmatmul.bf16.gmra.mxu0 %v195
    %v880 = vpop.f32.mrf.mxu0
    %v881 = vadd.f32 %v868, %v880
    %v882 = vpop.f32.mrf.mxu0
    %883 = vdwg.mxu0
    %884 = vmatpush.bf16.msra.mxu0 %v746
    %885 = vmatpush.bf16.msra.mxu0 %v743
    %886 = vmatpush.bf16.msra.mxu0 %v740
    %887 = vmatpush.bf16.msra.mxu0 %v737
    %888 = vmatpush.bf16.msra.mxu0 %v734
    %889 = vmatpush.bf16.msra.mxu0 %v731
    %890 = vmatpush.bf16.msra.mxu0 %v728
    %891 = vmatpush.bf16.msra.mxu0 %v725
    %892 = vmatmul.bf16.gmra.mxu0 %v196
    %v893 = vpop.f32.mrf.mxu0
    %v894 = vadd.f32 %v881, %v893
    %v895 = vpop.f32.mrf.mxu0
    %896 = vdwg.mxu0
    %897 = vmatpush.bf16.msra.mxu0 %v675
    %898 = vmatpush.bf16.msra.mxu0 %v672
    %899 = vmatpush.bf16.msra.mxu0 %v669
    %900 = vmatpush.bf16.msra.mxu0 %v666
    %901 = vmatpush.bf16.msra.mxu0 %v663
    %902 = vmatpush.bf16.msra.mxu0 %v660
    %903 = vmatpush.bf16.msra.mxu0 %v657
    %904 = vmatpush.bf16.msra.mxu0 %v654
    %905 = vmatmul.bf16.gmra.mxu0 %v193
    %v906 = vpop.f32.mrf.mxu0
    %v907 = vadd.f32 %v328, %v906
    %v908 = vpop.f32.mrf.mxu0
    %909 = vdwg.mxu0
    %910 = vmatpush.bf16.msra.mxu0 %v699
    %911 = vmatpush.bf16.msra.mxu0 %v696
    %912 = vmatpush.bf16.msra.mxu0 %v693
    %913 = vmatpush.bf16.msra.mxu0 %v690
    %914 = vmatpush.bf16.msra.mxu0 %v687
    %915 = vmatpush.bf16.msra.mxu0 %v684
    %916 = vmatpush.bf16.msra.mxu0 %v681
    %917 = vmatpush.bf16.msra.mxu0 %v678
    %918 = vmatmul.bf16.gmra.mxu0 %v194
    %v919 = vpop.f32.mrf.mxu0
    %v920 = vadd.f32 %v907, %v919
    %v921 = vpop.f32.mrf.mxu0
    %922 = vdwg.mxu0
    %923 = vmatpush.bf16.msra.mxu0 %v723
    %924 = vmatpush.bf16.msra.mxu0 %v720
    %925 = vmatpush.bf16.msra.mxu0 %v717
    %926 = vmatpush.bf16.msra.mxu0 %v714
    %927 = vmatpush.bf16.msra.mxu0 %v711
    %928 = vmatpush.bf16.msra.mxu0 %v708
    %929 = vmatpush.bf16.msra.mxu0 %v705
    %930 = vmatpush.bf16.msra.mxu0 %v702
    %931 = vmatmul.bf16.gmra.mxu0 %v195
    %v932 = vpop.f32.mrf.mxu0
    %v933 = vadd.f32 %v920, %v932
    %v934 = vpop.f32.mrf.mxu0
    %935 = vdwg.mxu0
    %936 = vmatpush.bf16.msra.mxu0 %v747
    %937 = vmatpush.bf16.msra.mxu0 %v744
    %938 = vmatpush.bf16.msra.mxu0 %v741
    %939 = vmatpush.bf16.msra.mxu0 %v738
    %940 = vmatpush.bf16.msra.mxu0 %v735
    %941 = vmatpush.bf16.msra.mxu0 %v732
    %942 = vmatpush.bf16.msra.mxu0 %v729
    %943 = vmatpush.bf16.msra.mxu0 %v726
    %944 = vmatmul.bf16.gmra.mxu0 %v196
    %v945 = vpop.f32.mrf.mxu0
    %v946 = vadd.f32 %v933, %v945
    %v947 = vpop.f32.mrf.mxu0
    %948 = vdwg.mxu0
    %949 = vmatpush.bf16.msra.mxu0 %v676
    %950 = vmatpush.bf16.msra.mxu0 %v673
    %951 = vmatpush.bf16.msra.mxu0 %v670
    %952 = vmatpush.bf16.msra.mxu0 %v667
    %953 = vmatpush.bf16.msra.mxu0 %v664
    %954 = vmatpush.bf16.msra.mxu0 %v661
    %955 = vmatpush.bf16.msra.mxu0 %v658
    %956 = vmatpush.bf16.msra.mxu0 %v655
    %957 = vmatmul.bf16.gmra.mxu0 %v193
    %v958 = vpop.f32.mrf.mxu0
    %v959 = vadd.f32 %v329, %v958
    %v960 = vpop.f32.mrf.mxu0
    %961 = vdwg.mxu0
    %962 = vmatpush.bf16.msra.mxu0 %v700
    %963 = vmatpush.bf16.msra.mxu0 %v697
    %964 = vmatpush.bf16.msra.mxu0 %v694
    %965 = vmatpush.bf16.msra.mxu0 %v691
    %966 = vmatpush.bf16.msra.mxu0 %v688
    %967 = vmatpush.bf16.msra.mxu0 %v685
    %968 = vmatpush.bf16.msra.mxu0 %v682
    %969 = vmatpush.bf16.msra.mxu0 %v679
    %970 = vmatmul.bf16.gmra.mxu0 %v194
    %v971 = vpop.f32.mrf.mxu0
    %v972 = vadd.f32 %v959, %v971
    %v973 = vpop.f32.mrf.mxu0
    %974 = vdwg.mxu0
    %975 = vmatpush.bf16.msra.mxu0 %v724
    %976 = vmatpush.bf16.msra.mxu0 %v721
    %977 = vmatpush.bf16.msra.mxu0 %v718
    %978 = vmatpush.bf16.msra.mxu0 %v715
    %979 = vmatpush.bf16.msra.mxu0 %v712
    %980 = vmatpush.bf16.msra.mxu0 %v709
    %981 = vmatpush.bf16.msra.mxu0 %v706
    %982 = vmatpush.bf16.msra.mxu0 %v703
    %983 = vmatmul.bf16.gmra.mxu0 %v195
    %v984 = vpop.f32.mrf.mxu0
    %v985 = vadd.f32 %v972, %v984
    %v986 = vpop.f32.mrf.mxu0
    %987 = vdwg.mxu0
    %988 = vmatpush.bf16.msra.mxu0 %v748
    %989 = vmatpush.bf16.msra.mxu0 %v745
    %990 = vmatpush.bf16.msra.mxu0 %v742
    %991 = vmatpush.bf16.msra.mxu0 %v739
    %992 = vmatpush.bf16.msra.mxu0 %v736
    %993 = vmatpush.bf16.msra.mxu0 %v733
    %994 = vmatpush.bf16.msra.mxu0 %v730
    %995 = vmatpush.bf16.msra.mxu0 %v727
    %996 = vmatmul.bf16.gmra.mxu0 %v196
    %v997 = vpop.f32.mrf.mxu0
    %v998 = vadd.f32 %v985, %v997
    %v999 = vpop.f32.mrf.mxu0
    %1000 = vdwg.mxu0
    %v1001 = vtanh.pop %v894
    %v1002 = vtanh.pop %v946
    %v1003 = vtanh.pop %v998
    %v1004 = vpack.c.bf16 %v1001, %v1001
    %v1005 = vpack.c.bf16 %v1002, %v1002
    %v1006 = vpack.c.bf16 %v1003, %v1003
    %v1007 = vld [vmem:[#allocation6] sm:$0xf]
    %v1008 = vld [vmem:[#allocation6 + $0x4] sm:$0xf]
    %v1009 = vld [vmem:[#allocation6 + $0x8] sm:$0xf]
    %v1010 = vld [vmem:[#allocation6 + $0xc] sm:$0xf]
    %v1011 = vld [vmem:[#allocation6 + $0x10] sm:$0xf]
    %v1012 = vld [vmem:[#allocation6 + $0x14] sm:$0xf]
    %v1013 = vld [vmem:[#allocation6 + $0x18] sm:$0xf]
    %v1014 = vld [vmem:[#allocation6 + $0x1c] sm:$0xf]
    %v1015 = vld [vmem:[#allocation6 + $0x20] sm:$0xf]
    %v1016 = vld [vmem:[#allocation6 + $0x24] sm:$0xf]
    %v1017 = vld [vmem:[#allocation6 + $0x28] sm:$0xf]
    %v1018 = vld [vmem:[#allocation6 + $0x2c] sm:$0xf]
    %v1019 = vld [vmem:[#allocation6 + $0x30] sm:$0xf]
    %v1020 = vld [vmem:[#allocation6 + $0x34] sm:$0xf]
    %v1021 = vld [vmem:[#allocation6 + $0x38] sm:$0xf]
    %v1022 = vld [vmem:[#allocation6 + $0x3c] sm:$0xf]
    %v1023 = vld [vmem:[#allocation6 + $0x40] sm:$0xf]
    %v1024 = vld [vmem:[#allocation6 + $0x44] sm:$0xf]
    %v1025 = vld [vmem:[#allocation6 + $0x48] sm:$0xf]
    %v1026 = vld [vmem:[#allocation6 + $0x4c] sm:$0xf]
    %v1027 = vld [vmem:[#allocation6 + $0x50] sm:$0xf]
    %v1028 = vld [vmem:[#allocation6 + $0x54] sm:$0xf]
    %v1029 = vld [vmem:[#allocation6 + $0x58] sm:$0xf]
    %v1030 = vld [vmem:[#allocation6 + $0x5c] sm:$0xf]
    %v1031 = vld [vmem:[#allocation6 + $0x60] sm:$0xf]
    %v1032 = vld [vmem:[#allocation6 + $0x64] sm:$0xf]
    %v1033 = vld [vmem:[#allocation6 + $0x68] sm:$0xf]
    %v1034 = vld [vmem:[#allocation6 + $0x6c] sm:$0xf]
    %v1035 = vld [vmem:[#allocation6 + $0x70] sm:$0xf]
    %v1036 = vld [vmem:[#allocation6 + $0x74] sm:$0xf]
    %v1037 = vld [vmem:[#allocation6 + $0x78] sm:$0xf]
    %v1038 = vld [vmem:[#allocation6 + $0x7c] sm:$0xf]
    %v1039 = vld [vmem:[#allocation6 + $0x80] sm:$0xf]
    %v1040 = vld [vmem:[#allocation6 + $0x84] sm:$0xf]
    %v1041 = vld [vmem:[#allocation6 + $0x88] sm:$0xf]
    %v1042 = vld [vmem:[#allocation6 + $0x8c] sm:$0xf]
    %v1043 = vld [vmem:[#allocation6 + $0x90] sm:$0xf]
    %v1044 = vld [vmem:[#allocation6 + $0x94] sm:$0xf]
    %v1045 = vld [vmem:[#allocation6 + $0x98] sm:$0xf]
    %v1046 = vld [vmem:[#allocation6 + $0x9c] sm:$0xf]
    %v1047 = vld [vmem:[#allocation6 + $0xa0] sm:$0xf]
    %v1048 = vld [vmem:[#allocation6 + $0xa4] sm:$0xf]
    %v1049 = vld [vmem:[#allocation6 + $0xa8] sm:$0xf]
    %v1050 = vld [vmem:[#allocation6 + $0xac] sm:$0xf]
    %v1051 = vld [vmem:[#allocation6 + $0xb0] sm:$0xf]
    %v1052 = vld [vmem:[#allocation6 + $0xb4] sm:$0xf]
    %v1053 = vld [vmem:[#allocation6 + $0xb8] sm:$0xf]
    %v1054 = vld [vmem:[#allocation6 + $0xbc] sm:$0xf]
    %v1055 = vld [vmem:[%s6] sm:$0x1]
    %v1057 = vperm.slane %v1055, 0
    %v1107 = vunpack.c.l.b16 %v1007
    %v1108 = vunpack.c.l.b16 %v1008
    %v1109 = vunpack.c.l.b16 %v1009
    %v1110 = vunpack.c.l.b16 %v1010
    %v1111 = vunpack.c.l.b16 %v1011
    %v1112 = vunpack.c.l.b16 %v1012
    %v1113 = vunpack.c.l.b16 %v1013
    %v1114 = vunpack.c.l.b16 %v1014
    %v1115 = vunpack.c.l.b16 %v1015
    %v1116 = vunpack.c.l.b16 %v1016
    %v1117 = vunpack.c.l.b16 %v1017
    %v1118 = vunpack.c.l.b16 %v1018
    %v1119 = vunpack.c.l.b16 %v1019
    %v1120 = vunpack.c.l.b16 %v1020
    %v1121 = vunpack.c.l.b16 %v1021
    %v1122 = vunpack.c.l.b16 %v1022
    %v1123 = vunpack.c.l.b16 %v1023
    %v1124 = vunpack.c.l.b16 %v1024
    %v1125 = vunpack.c.l.b16 %v1025
    %v1126 = vunpack.c.l.b16 %v1026
    %v1127 = vunpack.c.l.b16 %v1027
    %v1128 = vunpack.c.l.b16 %v1028
    %v1129 = vunpack.c.l.b16 %v1029
    %v1130 = vunpack.c.l.b16 %v1030
    %v1131 = vunpack.c.l.b16 %v1031
    %v1132 = vunpack.c.l.b16 %v1032
    %v1133 = vunpack.c.l.b16 %v1033
    %v1134 = vunpack.c.l.b16 %v1034
    %v1135 = vunpack.c.l.b16 %v1035
    %v1136 = vunpack.c.l.b16 %v1036
    %v1137 = vunpack.c.l.b16 %v1037
    %v1138 = vunpack.c.l.b16 %v1038
    %v1139 = vunpack.c.l.b16 %v1039
    %v1140 = vunpack.c.l.b16 %v1040
    %v1141 = vunpack.c.l.b16 %v1041
    %v1142 = vunpack.c.l.b16 %v1042
    %v1143 = vunpack.c.l.b16 %v1043
    %v1144 = vunpack.c.l.b16 %v1044
    %v1145 = vunpack.c.l.b16 %v1045
    %v1146 = vunpack.c.l.b16 %v1046
    %v1147 = vunpack.c.l.b16 %v1047
    %v1148 = vunpack.c.l.b16 %v1048
    %v1149 = vunpack.c.l.b16 %v1049
    %v1150 = vunpack.c.l.b16 %v1050
    %v1151 = vunpack.c.l.b16 %v1051
    %v1152 = vunpack.c.l.b16 %v1052
    %v1153 = vunpack.c.l.b16 %v1053
    %v1154 = vunpack.c.l.b16 %v1054
    %v1155 = vpack.c.b16 %v1108, %v1107
    %v1156 = vpack.c.b16 %v1110, %v1109
    %v1157 = vpack.c.b16 %v1112, %v1111
    %v1158 = vpack.c.b16 %v1114, %v1113
    %v1159 = vpack.c.b16 %v1116, %v1115
    %v1160 = vpack.c.b16 %v1118, %v1117
    %v1161 = vpack.c.b16 %v1120, %v1119
    %v1162 = vpack.c.b16 %v1122, %v1121
    %v1163 = vpack.c.b16 %v1124, %v1123
    %v1164 = vpack.c.b16 %v1126, %v1125
    %v1165 = vpack.c.b16 %v1128, %v1127
    %v1166 = vpack.c.b16 %v1130, %v1129
    %v1167 = vpack.c.b16 %v1132, %v1131
    %v1168 = vpack.c.b16 %v1134, %v1133
    %v1169 = vpack.c.b16 %v1136, %v1135
    %v1170 = vpack.c.b16 %v1138, %v1137
    %v1171 = vpack.c.b16 %v1140, %v1139
    %v1172 = vpack.c.b16 %v1142, %v1141
    %v1173 = vpack.c.b16 %v1144, %v1143
    %v1174 = vpack.c.b16 %v1146, %v1145
    %v1175 = vpack.c.b16 %v1148, %v1147
    %v1176 = vpack.c.b16 %v1150, %v1149
    %v1177 = vpack.c.b16 %v1152, %v1151
    %v1178 = vpack.c.b16 %v1154, %v1153
    %1203 = vmatpush.bf16.msra.mxu0 %v1162
    %1204 = vmatpush.bf16.msra.mxu0 %v1161
    %1205 = vmatpush.bf16.msra.mxu0 %v1160
    %1206 = vmatpush.bf16.msra.mxu0 %v1159
    %1207 = vmatpush.bf16.msra.mxu0 %v1158
    %1208 = vmatpush.bf16.msra.mxu0 %v1157
    %1209 = vmatpush.bf16.msra.mxu0 %v1156
    %1210 = vmatpush.bf16.msra.mxu0 %v1155
    %1211 = vmatmul.bf16.gmra.mxu0 %v1004
    %v1212 = vpop.f32.mrf.mxu0
    %v1213 = vadd.f32 %v1057, %v1212
    %v1214 = vpop.f32.mrf.mxu0
    %1215 = vdwg.mxu0
    %1216 = vmatpush.bf16.msra.mxu0 %v1170
    %1217 = vmatpush.bf16.msra.mxu0 %v1169
    %1218 = vmatpush.bf16.msra.mxu0 %v1168
    %1219 = vmatpush.bf16.msra.mxu0 %v1167
    %1220 = vmatpush.bf16.msra.mxu0 %v1166
    %1221 = vmatpush.bf16.msra.mxu0 %v1165
    %1222 = vmatpush.bf16.msra.mxu0 %v1164
    %1223 = vmatpush.bf16.msra.mxu0 %v1163
    %1224 = vmatmul.bf16.gmra.mxu0 %v1005
    %v1225 = vpop.f32.mrf.mxu0
    %v1226 = vadd.f32 %v1213, %v1225
    %v1227 = vpop.f32.mrf.mxu0
    %1228 = vdwg.mxu0
    %1229 = vmatpush.bf16.msra.mxu0 %v1178
    %1230 = vmatpush.bf16.msra.mxu0 %v1177
    %1231 = vmatpush.bf16.msra.mxu0 %v1176
    %1232 = vmatpush.bf16.msra.mxu0 %v1175
    %1233 = vmatpush.bf16.msra.mxu0 %v1174
    %1234 = vmatpush.bf16.msra.mxu0 %v1173
    %1235 = vmatpush.bf16.msra.mxu0 %v1172
    %1236 = vmatpush.bf16.msra.mxu0 %v1171
    %1237 = vmatmul.bf16.gmra.mxu0 %v1006
    %v1238 = vpop.f32.mrf.mxu0
    %v1239 = vadd.f32 %v1226, %v1238
    %v1240 = vpop.f32.mrf.mxu0
    %1241 = vdwg.mxu0
    %v1242 = vtanh.pop %v1239
    %1243 = vst [vmem:[%s7] sm:$0xff] %v1242
    // Predicated region
    $region42: #{model_actor_forward.1} parent=1 // pred_check
      _
    $region43: #{model_actor_forward.1} parent=1 // pred_check_branch
      %1245 = sbr.rel (0) target = $region45
    $region44: #{model_actor_forward.1} parent=1 // pred_region
      _
    $region45: #{model_actor_forward.1} parent=1 // pred_fallthru
      _
    // Predicated region
    $region46: #{model_actor_forward.1} parent=1 // pred_check
      _
    $region47: #{model_actor_forward.1} parent=1 // pred_check_branch
      %1247 = sbr.rel (0) target = $region49
    $region48: #{model_actor_forward.1} parent=1 // pred_region
      _
    $region49: #{model_actor_forward.1} parent=1 // pred_fallthru
      _
    %1248 = vsyncpa [#allocation3], 1
    %1249 = vsyncpa [#allocation5], 1

</llo_original>
